<compile_context>
chip_gen: v6e
topology: v6e:2x2x1
jax: 0.10.0
libtpu: 0.0.40
codegen_flags: <defaults>
</compile_context>

<pallas_src>
from functools import lru_cache

import jax
import jax.numpy as jnp
from jax.experimental import pallas as pl
from jax.experimental.pallas import tpu as pltpu


def _collate_kernel(a_ref, b_ref, c_ref, x_ref, y_ref, z_ref):
    # Three lane-aligned, full-density identity copies (one per field).
    x_ref[...] = a_ref[...]
    y_ref[...] = b_ref[...]
    z_ref[...] = c_ref[...]


@lru_cache(maxsize=1)
def _vmem_capacity_bytes():
    """Physical VMEM per TensorCore (128 MiB v5e/v6e, 64 MiB v7x)."""
    try:
        return int(pltpu.get_tpu_info().vmem_capacity_bytes)
    except Exception:
        return 64 * 1024 * 1024  # conservative (v7x-sized) fallback


def _sublane_tile(itemsize):
    # Sublane packing tile per dtype width: f32 -> 8, bf16 -> 16, int8/fp8 -> 32.
    return {4: 8, 2: 16, 1: 32}.get(itemsize, 8)


def _choose_lane_tile(N, B, itemsize, budget_bytes):
    """Largest lane tile Nt such that:
      * Nt is a multiple of 128 and divides N (required by the per-field
        block-offset index maps),
      * the double-buffered VMEM footprint
            2 * (3 inputs + 3 outputs) * B_pad * Nt * itemsize
        stays under budget_bytes (B_pad = B rounded up to the sublane tile),
      * the grid keeps >= 2 steps whenever N >= 256 (so both v7x TensorCores
        get work on this memory-bound copy).
    Assumes N % 128 == 0 (caller guarantees it)."""
    tile = _sublane_tile(itemsize)
    b_pad = -(-B // tile) * tile
    max_nt = budget_bytes // (12 * b_pad * itemsize)
    max_nt = max(128, (max_nt // 128) * 128)
    if N >= 256:
        # Never let the grid collapse to a single step.
        max_nt = max(128, min(max_nt, (N // 2 // 128) * 128))
    nt = (min(max_nt, N) // 128) * 128
    while N % nt != 0:
        nt -= 128
    return nt


@jax.jit
def default_collate_stacked(batch):
    """batch: (B, 3, C, H, W) -> three stacked (B, C, H, W) arrays (device-side
    contract; this is where the Pallas kernel runs)."""
    B, T, C, H, W = batch.shape
    assert T == 3, "each batch item must be a 3-tuple"
    N = C * H * W
    itemsize = jnp.dtype(batch.dtype).itemsize
    out_shape = (B, C, H, W)

    if N % 128 != 0:
        # TODO(synk): ragged (non-128-aligned) lane dim — plain XLA unzip; the
        # per-field block-offset BlockSpecs below require Nt | N.
        flat = batch.reshape(B, 3, N)
        return (flat[:, 0].reshape(out_shape),
                flat[:, 1].reshape(out_shape),
                flat[:, 2].reshape(out_shape))

    # Lane-dense view; free for a contiguous array (no HBM movement).
    flat2 = batch.reshape(B, 3 * N)

    vmem_cap = _vmem_capacity_bytes()
    budget = vmem_cap // 4                              # double-buffered footprint target
    vmem_limit = min((vmem_cap * 3) // 4, 96 * 1024 * 1024)

    Nt = _choose_lane_tile(N, B, itemsize, budget)
    tpf = N // Nt                                       # tiles per field
    grid = (tpf,)

    x, y, z = pl.pallas_call(
        _collate_kernel,
        out_shape=tuple(
            jax.ShapeDtypeStruct((B, N), batch.dtype) for _ in range(3)
        ),
        grid_spec=pltpu.PrefetchScalarGridSpec(
            num_scalar_prefetch=0,
            grid=grid,
            # The same (B, 3*N) array is passed three times; each in_spec
            # selects that field's lane window: element offset f*N + n*Nt
            # == block index f*tpf + n (valid because Nt | N).
            in_specs=[
                pl.BlockSpec((B, Nt), (lambda n, f=f: (0, f * tpf + n)))
                for f in range(3)
            ],
            out_specs=[
                pl.BlockSpec((B, Nt), lambda n: (0, n)) for _ in range(3)
            ],
        ),
        compiler_params=pltpu.CompilerParams(
            # N-tiles are independent -> shards across v7x's 2 TensorCores.
            dimension_semantics=("parallel",),
            vmem_limit_bytes=vmem_limit,
        ),
        cost_estimate=pl.CostEstimate(
            flops=0,
            transcendentals=0,
            bytes_accessed=6 * B * N * itemsize,   # 3*B*N read + 3*B*N written
        ),
    )(flat2, flat2, flat2)

    return (x.reshape(out_shape), y.reshape(out_shape), z.reshape(out_shape))


def default_collate(batch):
    """Exact DefaultCollateFunction semantics: three Python lists of per-item
    tensors.  The heavy lifting stays on-device in stacked form; the list
    materialization is one-time host-side API glue.  (For tiny batches a pure
    XLA slice bypass would avoid pallas_call launch overhead entirely — kept
    on the kernel path here so the kernel is exercised.)"""
    x, y, z = default_collate_stacked(batch)
    return list(x), list(y), list(z)


if __name__ == "__main__":
    key = jax.random.PRNGKey(0)
    B, C, H, W = 2, 4, 16, 16
    # Packed batch: B items, each a 3-tuple of (C, H, W) tensors.
    batch = jax.random.normal(key, (B, 3, C, H, W), dtype=jnp.float32)

    xs, ys, zs = default_collate(batch)
    jax.block_until_ready(xs[-1])
    jax.block_until_ready(ys[-1])
    jax.block_until_ready(zs[-1])

    # Reference check against the pure-JAX "unzip" semantics.
    ok = True
    for i in range(B):
        ok &= bool(jnp.array_equal(xs[i], batch[i, 0]))
        ok &= bool(jnp.array_equal(ys[i], batch[i, 1]))
        ok &= bool(jnp.array_equal(zs[i], batch[i, 2]))
    assert ok, "collate mismatch vs reference"

    print("KERNEL_OK")
</pallas_src>

<mosaic_0001>
module attributes {stable_mosaic.version = 11 : i64} {
  func.func @_collate_kernel(%arg0: i32, %arg1: memref<2x512xf32, #tpu.memory_space<vmem>>, %arg2: memref<2x512xf32, #tpu.memory_space<vmem>>, %arg3: memref<2x512xf32, #tpu.memory_space<vmem>>, %arg4: memref<2x512xf32, #tpu.memory_space<vmem>>, %arg5: memref<2x512xf32, #tpu.memory_space<vmem>>, %arg6: memref<2x512xf32, #tpu.memory_space<vmem>>) attributes {dimension_semantics = [#tpu.dimension_semantics<parallel>], iteration_bounds = array<i64: 2>, scalar_prefetch = 0 : i64, scratch_operands = 0 : i64, tpu.core_type = #tpu.core_type<tc>, window_params = [{transform_indices = @transform_0, window_bounds = array<i64: 2, 512>}, {transform_indices = @transform_1, window_bounds = array<i64: 2, 512>}, {transform_indices = @transform_2, window_bounds = array<i64: 2, 512>}, {transform_indices = @transform_3, window_bounds = array<i64: 2, 512>}, {transform_indices = @transform_4, window_bounds = array<i64: 2, 512>}, {transform_indices = @transform_5, window_bounds = array<i64: 2, 512>}]} {
    %c0 = arith.constant 0 : index
    %c0_0 = arith.constant 0 : index
    %0 = vector.load %arg1[%c0, %c0_0] : memref<2x512xf32, #tpu.memory_space<vmem>>, vector<2x512xf32>
    %c0_1 = arith.constant 0 : index
    %c0_2 = arith.constant 0 : index
    %1 = vector.load %arg4[%c0_1, %c0_2] : memref<2x512xf32, #tpu.memory_space<vmem>>, vector<2x512xf32>
    tpu.vector_store %arg4[%c0_1, %c0_2], %0 {strides = array<i32>} : memref<2x512xf32, #tpu.memory_space<vmem>>, vector<2x512xf32>,
    %c0_3 = arith.constant 0 : index
    %c0_4 = arith.constant 0 : index
    %2 = vector.load %arg2[%c0_3, %c0_4] : memref<2x512xf32, #tpu.memory_space<vmem>>, vector<2x512xf32>
    %c0_5 = arith.constant 0 : index
    %c0_6 = arith.constant 0 : index
    %3 = vector.load %arg5[%c0_5, %c0_6] : memref<2x512xf32, #tpu.memory_space<vmem>>, vector<2x512xf32>
    tpu.vector_store %arg5[%c0_5, %c0_6], %2 {strides = array<i32>} : memref<2x512xf32, #tpu.memory_space<vmem>>, vector<2x512xf32>,
    %c0_7 = arith.constant 0 : index
    %c0_8 = arith.constant 0 : index
    %4 = vector.load %arg3[%c0_7, %c0_8] : memref<2x512xf32, #tpu.memory_space<vmem>>, vector<2x512xf32>
    %c0_9 = arith.constant 0 : index
    %c0_10 = arith.constant 0 : index
    %5 = vector.load %arg6[%c0_9, %c0_10] : memref<2x512xf32, #tpu.memory_space<vmem>>, vector<2x512xf32>
    tpu.vector_store %arg6[%c0_9, %c0_10], %4 {strides = array<i32>} : memref<2x512xf32, #tpu.memory_space<vmem>>, vector<2x512xf32>,
    return
  }
  func.func @transform_0(%arg0: i32) -> (i32, i32) {
    %c0_i32 = arith.constant 0 : i32
    %0 = arith.addi %c0_i32, %arg0 : i32
    %c0_i32_0 = arith.constant 0 : i32
    %c0_i32_1 = arith.constant 0 : i32
    return %c0_i32_0, %0 : i32, i32
  }
  func.func @transform_1(%arg0: i32) -> (i32, i32) {
    %c2_i32 = arith.constant 2 : i32
    %0 = arith.addi %c2_i32, %arg0 : i32
    %c0_i32 = arith.constant 0 : i32
    %c0_i32_0 = arith.constant 0 : i32
    return %c0_i32, %0 : i32, i32
  }
  func.func @transform_2(%arg0: i32) -> (i32, i32) {
    %c4_i32 = arith.constant 4 : i32
    %0 = arith.addi %c4_i32, %arg0 : i32
    %c0_i32 = arith.constant 0 : i32
    %c0_i32_0 = arith.constant 0 : i32
    return %c0_i32, %0 : i32, i32
  }
  func.func @transform_3(%arg0: i32) -> (i32, i32) {
    %c0_i32 = arith.constant 0 : i32
    %c0_i32_0 = arith.constant 0 : i32
    return %c0_i32, %arg0 : i32, i32
  }
  func.func @transform_4(%arg0: i32) -> (i32, i32) {
    %c0_i32 = arith.constant 0 : i32
    %c0_i32_0 = arith.constant 0 : i32
    return %c0_i32, %arg0 : i32, i32
  }
  func.func @transform_5(%arg0: i32) -> (i32, i32) {
    %c0_i32 = arith.constant 0 : i32
    %c0_i32_0 = arith.constant 0 : i32
    return %c0_i32, %arg0 : i32, i32
  }
}

</mosaic_0001>

<llo_original>
// kernel: default_collate_stacked.1
$region0: #{default_collate_stacked.1}
  #allocation0 [shape = 'u32[]', space=smem, size = 0x4, offset = 0x4, fixed_abs, tag = 'smem constant byte address 0x4 - core index']
  #allocation1 [shape = 'u32[144,128]{1,0:T(1,128)}', space=vmem, size = 0x12000, scoped, tag = 'internal scratch']
  %s0 = inlined_call_operand.vmem [shape: f32[2,3072], index: 0, kind: input, shape index: {}, may-alias: {0,1,2}]
  %s1 = inlined_call_operand.vmem [shape: f32[2,3072], index: 1, kind: input, shape index: {}, may-alias: {0,1,2}]
  %s2 = inlined_call_operand.vmem [shape: f32[2,3072], index: 2, kind: input, shape index: {}, may-alias: {0,1,2}]
  %s3 = inlined_call_operand.vmem [shape: f32[2,1024], index: 3, kind: output, shape index: {0}]
  %s4 = inlined_call_operand.vmem [shape: f32[2,1024], index: 4, kind: output, shape index: {1}]
  %s5 = inlined_call_operand.vmem [shape: f32[2,1024], index: 5, kind: output, shape index: {2}]
  %6 = xla_tuple %s3, %s4, %s5
  %s7 = sld [smem:[#allocation0]]
  $region61: #{default_collate_stacked.1} parent=0
    _
  %s9 = ssub.s32 1, %s7
  %s10 = scalar_select 0, %s9, %s7
  loop: start=0, step=1, limit=4
  $region2: #{default_collate_stacked.1} parent=0 // loop_pre_header
    _
  $region3: #{default_collate_stacked.1} parent=0 // loop_header
    %s12 = sphi 0, %s16
    %p13 = scmp.ge.s32.totalorder %s12, 4
    %s22 = sphi 0, %s24
    %s25 = sphi 0, %s22
    %s26 = sphi 0, %s25
    %s42 = sphi 0, %s26
    %s50 = sphi 0, %s52
    %s53 = sphi 0, %s50
    %s54 = sphi 0, %s53
    %s70 = sphi 0, %s54
    %s78 = sphi 0, %s80
    %s81 = sphi 0, %s78
    %s82 = sphi 0, %s81
    %s98 = sphi 0, %s82
    %s104 = sphi 0, %s106
    %s107 = sphi 0, %s104
    %s108 = sphi 0, %s107
    %s124 = sphi 0, %s108
    %s130 = sphi 0, %s132
    %s133 = sphi 0, %s130
    %s134 = sphi 0, %s133
    %s150 = sphi 0, %s134
    %s156 = sphi 0, %s158
    %s159 = sphi 0, %s156
    %s160 = sphi 0, %s159
    %s176 = sphi 0, %s160
  $region4: #{default_collate_stacked.1} parent=0 // loop_header_branch
    %15 = sbr.rel (%p13) target = $region8
  $region5: #{default_collate_stacked.1} parent=0 // loop_body
    %s17 = ssub.s32 %s12, 1
    %s18 = ssub.s32 %s12, 2
    %s19 = sadd.s32 %s12, 1
    %s20 = ssub.s32 %s12, %s19
    %p21 = scmp.eq.s32.totalorder %s20, 0
    %s23 = sadd.s32 %s22, 1
    %s24 = scalar_select %p21, %s22, %s23
    %p27 = pneg %p21
    %p28 = scmp.eq.s32.totalorder %s12, 1
    %p29 = por %p27, %p28
    %p30 = scmp.ne.s32.totalorder %s22, %s25
    %p31 = scmp.eq.s32.totalorder %s12, 0
    %p32 = por %p30, %p31
    %p33 = scmp.ne.s32.totalorder %s22, %s25
    %p34 = scmp.eq.s32.totalorder %s17, 1
    %p35 = por %p33, %p34
    %p36 = scmp.ne.s32.totalorder %s25, %s26
    %p37 = scmp.eq.s32.totalorder %s17, 0
    %p38 = por %p36, %p37
    %p39 = scmp.ne.s32.totalorder %s25, %s26
    %p40 = scmp.eq.s32.totalorder %s18, 1
    %p41 = por %p39, %p40
    %p43 = scmp.ne.s32.totalorder %s26, %s42
    %p44 = scmp.eq.s32.totalorder %s18, 0
    %p45 = por %p43, %p44
    %s46 = sadd.s32 %s12, 2
    %s47 = sadd.s32 %s19, 2
    %s48 = ssub.s32 %s46, %s47
    %p49 = scmp.eq.s32.totalorder %s48, 0
    %s51 = sadd.s32 %s50, 1
    %s52 = scalar_select %p49, %s50, %s51
    %p55 = pneg %p49
    %p56 = scmp.eq.s32.totalorder %s12, 1
    %p57 = por %p55, %p56
    %p58 = scmp.ne.s32.totalorder %s50, %s53
    %p59 = scmp.eq.s32.totalorder %s12, 0
    %p60 = por %p58, %p59
    %p61 = scmp.ne.s32.totalorder %s50, %s53
    %p62 = scmp.eq.s32.totalorder %s17, 1
    %p63 = por %p61, %p62
    %p64 = scmp.ne.s32.totalorder %s53, %s54
    %p65 = scmp.eq.s32.totalorder %s17, 0
    %p66 = por %p64, %p65
    %p67 = scmp.ne.s32.totalorder %s53, %s54
    %p68 = scmp.eq.s32.totalorder %s18, 1
    %p69 = por %p67, %p68
    %p71 = scmp.ne.s32.totalorder %s54, %s70
    %p72 = scmp.eq.s32.totalorder %s18, 0
    %p73 = por %p71, %p72
    %s74 = sadd.s32 %s12, 4
    %s75 = sadd.s32 %s19, 4
    %s76 = ssub.s32 %s74, %s75
    %p77 = scmp.eq.s32.totalorder %s76, 0
    %s79 = sadd.s32 %s78, 1
    %s80 = scalar_select %p77, %s78, %s79
    %p83 = pneg %p77
    %p84 = scmp.eq.s32.totalorder %s12, 1
    %p85 = por %p83, %p84
    %p86 = scmp.ne.s32.totalorder %s78, %s81
    %p87 = scmp.eq.s32.totalorder %s12, 0
    %p88 = por %p86, %p87
    %p89 = scmp.ne.s32.totalorder %s78, %s81
    %p90 = scmp.eq.s32.totalorder %s17, 1
    %p91 = por %p89, %p90
    %p92 = scmp.ne.s32.totalorder %s81, %s82
    %p93 = scmp.eq.s32.totalorder %s17, 0
    %p94 = por %p92, %p93
    %p95 = scmp.ne.s32.totalorder %s81, %s82
    %p96 = scmp.eq.s32.totalorder %s18, 1
    %p97 = por %p95, %p96
    %p99 = scmp.ne.s32.totalorder %s82, %s98
    %p100 = scmp.eq.s32.totalorder %s18, 0
    %p101 = por %p99, %p100
    %s102 = ssub.s32 %s12, %s19
    %p103 = scmp.eq.s32.totalorder %s102, 0
    %s105 = sadd.s32 %s104, 1
    %s106 = scalar_select %p103, %s104, %s105
    %p109 = pneg %p103
    %p110 = scmp.eq.s32.totalorder %s12, 1
    %p111 = por %p109, %p110
    %p112 = scmp.ne.s32.totalorder %s104, %s107
    %p113 = scmp.eq.s32.totalorder %s12, 0
    %p114 = por %p112, %p113
    %p115 = scmp.ne.s32.totalorder %s104, %s107
    %p116 = scmp.eq.s32.totalorder %s17, 1
    %p117 = por %p115, %p116
    %p118 = scmp.ne.s32.totalorder %s107, %s108
    %p119 = scmp.eq.s32.totalorder %s17, 0
    %p120 = por %p118, %p119
    %p121 = scmp.ne.s32.totalorder %s107, %s108
    %p122 = scmp.eq.s32.totalorder %s18, 1
    %p123 = por %p121, %p122
    %p125 = scmp.ne.s32.totalorder %s108, %s124
    %p126 = scmp.eq.s32.totalorder %s18, 0
    %p127 = por %p125, %p126
    %s128 = ssub.s32 %s12, %s19
    %p129 = scmp.eq.s32.totalorder %s128, 0
    %s131 = sadd.s32 %s130, 1
    %s132 = scalar_select %p129, %s130, %s131
    %p135 = pneg %p129
    %p136 = scmp.eq.s32.totalorder %s12, 1
    %p137 = por %p135, %p136
    %p138 = scmp.ne.s32.totalorder %s130, %s133
    %p139 = scmp.eq.s32.totalorder %s12, 0
    %p140 = por %p138, %p139
    %p141 = scmp.ne.s32.totalorder %s130, %s133
    %p142 = scmp.eq.s32.totalorder %s17, 1
    %p143 = por %p141, %p142
    %p144 = scmp.ne.s32.totalorder %s133, %s134
    %p145 = scmp.eq.s32.totalorder %s17, 0
    %p146 = por %p144, %p145
    %p147 = scmp.ne.s32.totalorder %s133, %s134
    %p148 = scmp.eq.s32.totalorder %s18, 1
    %p149 = por %p147, %p148
    %p151 = scmp.ne.s32.totalorder %s134, %s150
    %p152 = scmp.eq.s32.totalorder %s18, 0
    %p153 = por %p151, %p152
    %s154 = ssub.s32 %s12, %s19
    %p155 = scmp.eq.s32.totalorder %s154, 0
    %s157 = sadd.s32 %s156, 1
    %s158 = scalar_select %p155, %s156, %s157
    %p161 = pneg %p155
    %p162 = scmp.eq.s32.totalorder %s12, 1
    %p163 = por %p161, %p162
    %p164 = scmp.ne.s32.totalorder %s156, %s159
    %p165 = scmp.eq.s32.totalorder %s12, 0
    %p166 = por %p164, %p165
    %p167 = scmp.ne.s32.totalorder %s156, %s159
    %p168 = scmp.eq.s32.totalorder %s17, 1
    %p169 = por %p167, %p168
    %p170 = scmp.ne.s32.totalorder %s159, %s160
    %p171 = scmp.eq.s32.totalorder %s17, 0
    %p172 = por %p170, %p171
    %p173 = scmp.ne.s32.totalorder %s159, %s160
    %p174 = scmp.eq.s32.totalorder %s18, 1
    %p175 = por %p173, %p174
    %p177 = scmp.ne.s32.totalorder %s160, %s176
    %p178 = scmp.eq.s32.totalorder %s18, 0
    %p179 = por %p177, %p178
    %p180 = scmp.le.s32.totalorder 1, %s12
    %p181 = scmp.lt.s32.totalorder %s12, 3
    %p182 = pnand %p180, %p181
    %p183 = pneg %p182
    // Predicated region
    $region9: #{default_collate_stacked.1} parent=5 // pred_check
      _
    $region10: #{default_collate_stacked.1} parent=5 // pred_check_branch
      %185 = sbr.rel (%p182) target = $region12
    $region11: #{default_collate_stacked.1} parent=5 // pred_region
      %s186 = ssub.s32 %s12, 1
    $region12: #{default_collate_stacked.1} parent=5 // pred_fallthru
      _
    %p187 = scmp.lt.s32.totalorder %s12, 2
    // Predicated region
    $region13: #{default_collate_stacked.1} parent=5 // pred_check
      %p188 = pneg %p187
    $region14: #{default_collate_stacked.1} parent=5 // pred_check_branch
      %190 = sbr.rel (%p188) target = $region16
    $region15: #{default_collate_stacked.1} parent=5 // pred_region
      // Predicated region
      $region17: #{default_collate_stacked.1} parent=15 // pred_check
        %p191 = pneg %p32
      $region18: #{default_collate_stacked.1} parent=15 // pred_check_branch
        %193 = sbr.rel (%p191) target = $region20
      $region19: #{default_collate_stacked.1} parent=15 // pred_region
        %s194 = smul.u32 4, %s12
        %p195 = scmp.lt.s32.totalorder %s194, 23
        %s196 = scalar_select %p195, %s194, 23
        %s197 = smul.addr %s196, 2
        %s198 = scalar_lea.vmem %s0, %s197
        %s199 = smul.u32 4, %s12
      $region20: #{default_collate_stacked.1} parent=15 // pred_fallthru
        _
      // Predicated region
      $region21: #{default_collate_stacked.1} parent=15 // pred_check
        %p200 = pneg %p60
      $region22: #{default_collate_stacked.1} parent=15 // pred_check_branch
        %202 = sbr.rel (%p200) target = $region24
      $region23: #{default_collate_stacked.1} parent=15 // pred_region
        %s203 = sadd.s32 %s12, 2
        %s204 = smul.u32 4, %s203
        %p205 = scmp.lt.s32.totalorder %s204, 23
        %s206 = scalar_select %p205, %s204, 23
        %s207 = smul.addr %s206, 2
        %s208 = scalar_lea.vmem %s1, %s207
        %s209 = sadd.s32 %s12, 2
        %s210 = smul.u32 4, %s209
      $region24: #{default_collate_stacked.1} parent=15 // pred_fallthru
        _
      // Predicated region
      $region25: #{default_collate_stacked.1} parent=15 // pred_check
        %p211 = pneg %p88
      $region26: #{default_collate_stacked.1} parent=15 // pred_check_branch
        %213 = sbr.rel (%p211) target = $region28
      $region27: #{default_collate_stacked.1} parent=15 // pred_region
        %s214 = sadd.s32 %s12, 4
        %s215 = smul.u32 4, %s214
        %p216 = scmp.lt.s32.totalorder %s215, 23
        %s217 = scalar_select %p216, %s215, 23
        %s218 = smul.addr %s217, 2
        %s219 = scalar_lea.vmem %s2, %s218
        %s220 = sadd.s32 %s12, 4
        %s221 = smul.u32 4, %s220
      $region28: #{default_collate_stacked.1} parent=15 // pred_fallthru
        _
    $region16: #{default_collate_stacked.1} parent=5 // pred_fallthru
      _
    %p222 = scmp.le.s32.totalorder 1, %s12
    %p223 = scmp.lt.s32.totalorder %s12, 3
    %p224 = pnand %p222, %p223
    %p225 = pneg %p224
    // Predicated region
    $region29: #{default_collate_stacked.1} parent=5 // pred_check
      _
    $region30: #{default_collate_stacked.1} parent=5 // pred_check_branch
      %227 = sbr.rel (%p224) target = $region32
    $region31: #{default_collate_stacked.1} parent=5 // pred_region
      %s228 = ssub.s32 %s12, 1
      %s229 = smul.u32 4, %s17
      %p230 = scmp.lt.s32.totalorder %s229, 23
      %s231 = scalar_select %p230, %s229, 23
      %s232 = smul.addr %s231, 2
      %s233 = scalar_lea.vmem %s0, %s232
      %p234 = pneg %p38
      %p235 = pneg %p35
      %s236 = sadd.s32 %s17, 2
      %s237 = smul.u32 4, %s236
      %p238 = scmp.lt.s32.totalorder %s237, 23
      %s239 = scalar_select %p238, %s237, 23
      %s240 = smul.addr %s239, 2
      %s241 = scalar_lea.vmem %s1, %s240
      %p242 = pneg %p66
      %p243 = pneg %p63
      %s244 = sadd.s32 %s17, 4
      %s245 = smul.u32 4, %s244
      %p246 = scmp.lt.s32.totalorder %s245, 23
      %s247 = scalar_select %p246, %s245, 23
      %s248 = smul.addr %s247, 2
      %s249 = scalar_lea.vmem %s2, %s248
      %p250 = pneg %p94
      %p251 = pneg %p91
      %p252 = pneg %p120
      %p253 = pneg %p117
      %s254 = smul.u32 4, %s17
      %p255 = scmp.lt.s32.totalorder %s254, 7
      %s256 = scalar_select %p255, %s254, 7
      %s257 = smul.addr %s256, 2
      %s258 = scalar_lea.vmem %s3, %s257
      %p259 = pneg %p146
      %p260 = pneg %p143
      %s261 = smul.u32 4, %s17
      %p262 = scmp.lt.s32.totalorder %s261, 7
      %s263 = scalar_select %p262, %s261, 7
      %s264 = smul.addr %s263, 2
      %s265 = scalar_lea.vmem %s4, %s264
      %p266 = pneg %p172
      %p267 = pneg %p169
      %s268 = smul.u32 4, %s17
      %p269 = scmp.lt.s32.totalorder %s268, 7
      %s270 = scalar_select %p269, %s268, 7
      %s271 = smul.addr %s270, 2
      %s272 = scalar_lea.vmem %s5, %s271
      %s273 = smul.u32 4, %s17
      %p274 = scmp.lt.s32.totalorder %s273, 23
      %s275 = scalar_select %p274, %s273, 23
      %s276 = smul.addr %s275, 2
      %s277 = scalar_lea.vmem %s0, %s276
      %s278 = smul.u32 4, %s17
      %s279 = sadd.s32 %s17, 2
      %s280 = smul.u32 4, %s279
      %p281 = scmp.lt.s32.totalorder %s280, 23
      %s282 = scalar_select %p281, %s280, 23
      %s283 = smul.addr %s282, 2
      %s284 = scalar_lea.vmem %s1, %s283
      %s285 = sadd.s32 %s17, 2
      %s286 = smul.u32 4, %s285
      %s287 = sadd.s32 %s17, 4
      %s288 = smul.u32 4, %s287
      %p289 = scmp.lt.s32.totalorder %s288, 23
      %s290 = scalar_select %p289, %s288, 23
      %s291 = smul.addr %s290, 2
      %s292 = scalar_lea.vmem %s2, %s291
      %s293 = sadd.s32 %s17, 4
      %s294 = smul.u32 4, %s293
      %s295 = smul.u32 4, %s17
      %p296 = scmp.lt.s32.totalorder %s295, 7
      %s297 = scalar_select %p296, %s295, 7
      %s298 = smul.addr %s297, 2
      %s299 = scalar_lea.vmem %s3, %s298
      %s300 = smul.u32 4, %s17
      %s301 = smul.u32 4, %s17
      %p302 = scmp.lt.s32.totalorder %s301, 7
      %s303 = scalar_select %p302, %s301, 7
      %s304 = smul.addr %s303, 2
      %s305 = scalar_lea.vmem %s4, %s304
      %s306 = smul.u32 4, %s17
      %s307 = smul.u32 4, %s17
      %p308 = scmp.lt.s32.totalorder %s307, 7
      %s309 = scalar_select %p308, %s307, 7
      %s310 = smul.addr %s309, 2
      %s311 = scalar_lea.vmem %s5, %s310
      %s312 = smul.u32 4, %s17
      %v313 = vld [vmem:[%s277] sm:$0xff]
      %314 = vst [vmem:[%s299] sm:$0xff] %v313
      %v315 = vld [vmem:[%s284] sm:$0xff]
      %316 = vst [vmem:[%s305] sm:$0xff] %v315
      %v317 = vld [vmem:[%s292] sm:$0xff]
      %318 = vst [vmem:[%s311] sm:$0xff] %v317
      %s319 = smul.u32 4, %s17
      %p320 = scmp.lt.s32.totalorder %s319, 7
      %s321 = scalar_select %p320, %s319, 7
      %s322 = smul.addr %s321, 2
      %s323 = scalar_lea.vmem %s3, %s322
      %s324 = smul.u32 4, %s17
      %p325 = scmp.lt.s32.totalorder %s324, 7
      %s326 = scalar_select %p325, %s324, 7
      %s327 = smul.addr %s326, 2
      %s328 = scalar_lea.vmem %s4, %s327
      %s329 = smul.u32 4, %s17
      %p330 = scmp.lt.s32.totalorder %s329, 7
      %s331 = scalar_select %p330, %s329, 7
      %s332 = smul.addr %s331, 2
      %s333 = scalar_lea.vmem %s5, %s332
      // Predicated region
      $region33: #{default_collate_stacked.1} parent=31 // pred_check
        %p334 = pneg %p117
      $region34: #{default_collate_stacked.1} parent=31 // pred_check_branch
        %336 = sbr.rel (%p334) target = $region36
      $region35: #{default_collate_stacked.1} parent=31 // pred_region
        %s337 = smul.u32 4, %s17
      $region36: #{default_collate_stacked.1} parent=31 // pred_fallthru
        _
      // Predicated region
      $region37: #{default_collate_stacked.1} parent=31 // pred_check
        %p338 = pneg %p143
      $region38: #{default_collate_stacked.1} parent=31 // pred_check_branch
        %340 = sbr.rel (%p338) target = $region40
      $region39: #{default_collate_stacked.1} parent=31 // pred_region
        %s341 = smul.u32 4, %s17
      $region40: #{default_collate_stacked.1} parent=31 // pred_fallthru
        _
      // Predicated region
      $region41: #{default_collate_stacked.1} parent=31 // pred_check
        %p342 = pneg %p169
      $region42: #{default_collate_stacked.1} parent=31 // pred_check_branch
        %344 = sbr.rel (%p342) target = $region44
      $region43: #{default_collate_stacked.1} parent=31 // pred_region
        %s345 = smul.u32 4, %s17
      $region44: #{default_collate_stacked.1} parent=31 // pred_fallthru
        _
    $region32: #{default_collate_stacked.1} parent=5 // pred_fallthru
      _
    %p346 = scmp.le.s32.totalorder 2, %s12
    // Predicated region
    $region45: #{default_collate_stacked.1} parent=5 // pred_check
      %p347 = pneg %p346
    $region46: #{default_collate_stacked.1} parent=5 // pred_check_branch
      %349 = sbr.rel (%p347) target = $region48
    $region47: #{default_collate_stacked.1} parent=5 // pred_region
      %s350 = ssub.s32 %s12, 2
      // Predicated region
      $region49: #{default_collate_stacked.1} parent=47 // pred_check
        %p351 = pneg %p123
      $region50: #{default_collate_stacked.1} parent=47 // pred_check_branch
        %353 = sbr.rel (%p351) target = $region52
      $region51: #{default_collate_stacked.1} parent=47 // pred_region
        %s354 = smul.u32 4, %s18
        %p355 = scmp.lt.s32.totalorder %s354, 7
        %s356 = scalar_select %p355, %s354, 7
        %s357 = smul.addr %s356, 2
        %s358 = scalar_lea.vmem %s3, %s357
      $region52: #{default_collate_stacked.1} parent=47 // pred_fallthru
        _
      // Predicated region
      $region53: #{default_collate_stacked.1} parent=47 // pred_check
        %p359 = pneg %p149
      $region54: #{default_collate_stacked.1} parent=47 // pred_check_branch
        %361 = sbr.rel (%p359) target = $region56
      $region55: #{default_collate_stacked.1} parent=47 // pred_region
        %s362 = smul.u32 4, %s18
        %p363 = scmp.lt.s32.totalorder %s362, 7
        %s364 = scalar_select %p363, %s362, 7
        %s365 = smul.addr %s364, 2
        %s366 = scalar_lea.vmem %s4, %s365
      $region56: #{default_collate_stacked.1} parent=47 // pred_fallthru
        _
      // Predicated region
      $region57: #{default_collate_stacked.1} parent=47 // pred_check
        %p367 = pneg %p175
      $region58: #{default_collate_stacked.1} parent=47 // pred_check_branch
        %369 = sbr.rel (%p367) target = $region60
      $region59: #{default_collate_stacked.1} parent=47 // pred_region
        %s370 = smul.u32 4, %s18
        %p371 = scmp.lt.s32.totalorder %s370, 7
        %s372 = scalar_select %p371, %s370, 7
        %s373 = smul.addr %s372, 2
        %s374 = scalar_lea.vmem %s5, %s373
      $region60: #{default_collate_stacked.1} parent=47 // pred_fallthru
        _
    $region48: #{default_collate_stacked.1} parent=5 // pred_fallthru
      _
  $region6: #{default_collate_stacked.1} parent=0 // loop_footer
    %s16 = sadd.s32 1, %s12
  $region7: #{default_collate_stacked.1} parent=0 // loop_footer_branch
    %11 = sbr.rel target = $region3
  $region8: #{default_collate_stacked.1} parent=0 // loop_exit
    _

</llo_original>
